<compile_context>
chip_gen: v7x
topology: tpu7x:2x2x1
jax: 0.10.0
libtpu: 0.0.40
codegen_flags: <defaults>
</compile_context>

<pallas_src>
import jax
import jax.numpy as jnp
from jax.experimental import pallas as pl
from jax.experimental.pallas import tpu as pltpu


def attention_gate_kernel(g_ref, x_ref, wg_ref, wx_ref, b_ref, wpsi_ref,
                          bpsi_ref, out_ref):
    """One (batch-block, pixel-tile) grid step.

    g_ref    : (B_blk, F_g,  T_px)  gating features, pixels on lanes
    x_ref    : (B_blk, F_l,  T_px)  skip features, pixels on lanes
    wg_ref   : (F_int, F_g)         BN-folded W_g^T
    wx_ref   : (F_int, F_l)         BN-folded W_x^T
    b_ref    : (F_int, 1)           fused bias (b_g + b_x, BN folded)
    wpsi_ref : (1, F_int)           BN-folded psi weight (row -> MXU dot)
    bpsi_ref : (1,) in SMEM         BN-folded psi bias (scalar)
    out_ref  : (B_blk, F_l, T_px)   gated skip features
    """
    wg = wg_ref[...]
    wx = wx_ref[...]
    bias = b_ref[...]
    wpsi = wpsi_ref[...]                       # (1, F_int)
    bpsi = bpsi_ref[0]

    # Static unroll over the batch block (B_blk is small; trace-time constant).
    for bi in range(g_ref.shape[0]):
        gf = g_ref[bi].astype(jnp.float32)     # (F_g, T_px)
        xf = x_ref[bi].astype(jnp.float32)     # (F_l, T_px)
        # Two 1x1 convs as MXU matmuls over channels, single fused bias add.
        h = (jnp.dot(wg, gf, preferred_element_type=jnp.float32)
             + jnp.dot(wx, xf, preferred_element_type=jnp.float32)
             + bias)
        h = jnp.maximum(h, 0.0)                # ReLU (VPU)
        # psi conv (F_int -> 1) on the MXU, then sigmoid (EUP).
        psi = jnp.dot(wpsi, h, preferred_element_type=jnp.float32) + bpsi
        psi = jax.nn.sigmoid(psi)              # (1, T_px)
        out_ref[bi] = (xf * psi).astype(out_ref.dtype)   # lane-dense store


def _fold_bn(w, b, gamma, beta, mean, var, eps=1e-5):
    """Fold inference BatchNorm into a 1x1-conv weight (C_in, C_out) / bias."""
    scale = gamma / jnp.sqrt(var + eps)
    return w * scale[None, :], (b - mean) * scale + beta


def _vmem_budget_bytes():
    """Generation-aware budget for the streamed tiles.

    v7x has only 64 MiB physical VMEM shared by two TensorCores -> keep the
    per-call budget modest; v5e/v6e have 128 MiB so a larger budget is safe
    (we set vmem_limit_bytes explicitly, so v5e's 16 MiB scoped default does
    not apply).
    """
    try:
        cap = int(pltpu.get_tpu_info().vmem_capacity_bytes)
    except Exception:
        cap = 64 << 20
    if cap <= (64 << 20):
        return 16 << 20            # v7x-class
    return 24 << 20                # v5e / v6e


def _choose_tiling(N, HW, F_g, F_l, F_int, dtype_bytes, vmem_budget_bytes):
    """Pick (B_blk, T_px, n_px).

    Goals (in priority order):
      1. Keep at least 2 total grid steps so both v7x TensorCores get work.
      2. Make each grid step move ~>= 1 MiB of HBM traffic (memory-bound
         kernel; amortizes the ~0.35 us/step grid overhead and short DMAs).
      3. Stay inside the generation-aware VMEM budget.
    """
    # HBM bytes streamed per pixel per image (g read + x read + out write).
    stream_bpp = dtype_bytes * (F_g + 2 * F_l)
    # VMEM bytes per pixel per image: double-buffered g/x/out tiles plus ~4x
    # F_int f32 intermediate headroom (h, two dot partials, relu temp).
    vmem_bpp = 2 * dtype_bytes * (F_g + 2 * F_l) + 4 * 4 * F_int

    cap_px = vmem_budget_bytes // vmem_bpp
    cap_px = max(128, (cap_px // 128) * 128)
    cap_px = min(cap_px, 32768)          # keep per-step DMA latency reasonable
    t_px = HW if HW <= cap_px else cap_px
    n_px = pl.cdiv(HW, t_px)

    # Batch blocking: grow B_blk (a divisor of N) until each grid step streams
    # ~>= 1 MiB, without exceeding the VMEM budget or collapsing the grid
    # below 2 steps.
    target_bytes = 1 << 20
    b_blk = 1
    if t_px * stream_bpp < target_bytes:
        for cand in range(2, N + 1):
            if N % cand:
                continue
            if cand * t_px * vmem_bpp > vmem_budget_bytes:
                break
            if (N // cand) * n_px < 2:
                break
            b_blk = cand
            if b_blk * t_px * stream_bpp >= target_bytes:
                break

    # v7x megacore: if the whole problem is a single grid step, split the
    # pixel axis so there are (at least) two parallel steps.
    if (N // b_blk) * n_px < 2 and HW >= 256:
        t_px = ((pl.cdiv(HW, 2) + 127) // 128) * 128
        n_px = pl.cdiv(HW, t_px)

    return b_blk, t_px, n_px


def _vmem_limit_bytes(b_blk, t_px, F_g, F_l, F_int, dtype_bytes):
    """Explicit scoped-VMEM limit covering the chosen tiling (documents intent
    and avoids silent default-limit failures for wide-channel gates)."""
    tiles = 2 * b_blk * t_px * dtype_bytes * (F_g + 2 * F_l)   # g/x/out, 2-deep
    params = 2 * 4 * (F_int * (F_g + F_l) + 2 * F_int)         # tiny residents
    interm = 4 * 4 * F_int * t_px                              # f32 headroom
    est = tiles + params + interm + (2 << 20)
    return int(min(32 << 20, max(est, 16 << 20)))              # <= v7x scoped default


def attention_gate(g, x, params):
    """g: (N, F_g, H, W), x: (N, F_l, H, W) in f32 or bf16 (NCHW like PyTorch).

    Math accumulates in f32; the output has x.dtype.
    """
    N, F_g, H, W = g.shape
    _, F_l, _, _ = x.shape
    F_int = params["w_g"].shape[1]
    HW = H * W
    dtype_bytes = jnp.dtype(x.dtype).itemsize

    # ---- parameter prep (tiny, outside the hot path) ------------------------
    wg, bg = _fold_bn(params["w_g"], params["b_g"], params["bn_g_gamma"],
                      params["bn_g_beta"], params["bn_g_mean"], params["bn_g_var"])
    wx, bx = _fold_bn(params["w_x"], params["b_x"], params["bn_x_gamma"],
                      params["bn_x_beta"], params["bn_x_mean"], params["bn_x_var"])
    wpsi, bpsi = _fold_bn(params["w_psi"], params["b_psi"], params["bn_p_gamma"],
                          params["bn_p_beta"], params["bn_p_mean"], params["bn_p_var"])
    wg_t = wg.T.astype(jnp.float32)                # (F_int, F_g)
    wx_t = wx.T.astype(jnp.float32)                # (F_int, F_l)
    b_comb = (bg + bx).reshape(F_int, 1).astype(jnp.float32)     # fused biases
    wpsi_row = wpsi.reshape(1, F_int).astype(jnp.float32)        # psi on the MXU
    bpsi_s = bpsi.reshape(1).astype(jnp.float32)                 # scalar -> SMEM

    # ---- free reshapes: NCHW -> (N, C, H*W); channels on sublanes ------------
    g3 = g.reshape(N, F_g, HW)
    x3 = x.reshape(N, F_l, HW)

    budget = _vmem_budget_bytes()
    b_blk, t_px, n_px = _choose_tiling(N, HW, F_g, F_l, F_int, dtype_bytes, budget)
    vmem_limit = _vmem_limit_bytes(b_blk, t_px, F_g, F_l, F_int, dtype_bytes)

    # NOTE: the four resident parameter inputs are tiny (<< 100 KiB even for
    # the F_l=512 gates), so we leave them on the default 2-deep pipeline
    # rather than risking pipeline_mode=pl.Buffered(1); the VMEM estimate
    # above already accounts for both buffers.
    out3 = pl.pallas_call(
        attention_gate_kernel,
        out_shape=jax.ShapeDtypeStruct((N, F_l, HW), x.dtype),
        grid_spec=pltpu.PrefetchScalarGridSpec(
            num_scalar_prefetch=0,
            grid=(N // b_blk, n_px),
            in_specs=[
                pl.BlockSpec((b_blk, F_g, t_px), lambda nb, p: (nb, 0, p)),   # g
                pl.BlockSpec((b_blk, F_l, t_px), lambda nb, p: (nb, 0, p)),   # x
                pl.BlockSpec((F_int, F_g), lambda nb, p: (0, 0)),             # W_g^T
                pl.BlockSpec((F_int, F_l), lambda nb, p: (0, 0)),             # W_x^T
                pl.BlockSpec((F_int, 1), lambda nb, p: (0, 0)),               # b_g+b_x
                pl.BlockSpec((1, F_int), lambda nb, p: (0, 0)),               # w_psi row
                pl.BlockSpec(memory_space=pltpu.MemorySpace.SMEM),            # b_psi
            ],
            out_specs=pl.BlockSpec((b_blk, F_l, t_px), lambda nb, p: (nb, 0, p)),
        ),
        compiler_params=pltpu.CompilerParams(
            dimension_semantics=("parallel", "parallel"),
            vmem_limit_bytes=vmem_limit),
    )(g3, x3, wg_t, wx_t, b_comb, wpsi_row, bpsi_s)

    return out3.reshape(N, F_l, H, W)              # free reshape back to NCHW


def attention_gate_ref(g, x, params):
    """Pure-JAX reference (same folded-BN inference semantics, f32 math)."""
    hi = jax.lax.Precision.HIGHEST
    wg, bg = _fold_bn(params["w_g"], params["b_g"], params["bn_g_gamma"],
                      params["bn_g_beta"], params["bn_g_mean"], params["bn_g_var"])
    wx, bx = _fold_bn(params["w_x"], params["b_x"], params["bn_x_gamma"],
                      params["bn_x_beta"], params["bn_x_mean"], params["bn_x_var"])
    wpsi, bpsi = _fold_bn(params["w_psi"], params["b_psi"], params["bn_p_gamma"],
                          params["bn_p_beta"], params["bn_p_mean"], params["bn_p_var"])
    gcl = jnp.transpose(g, (0, 2, 3, 1)).astype(jnp.float32)
    xcl = jnp.transpose(x, (0, 2, 3, 1)).astype(jnp.float32)
    g1 = jnp.einsum("nhwc,cf->nhwf", gcl, wg, precision=hi) + bg
    x1 = jnp.einsum("nhwc,cf->nhwf", xcl, wx, precision=hi) + bx
    h = jnp.maximum(g1 + x1, 0.0)
    psi = jax.nn.sigmoid(
        jnp.einsum("nhwf,fo->nhwo", h, wpsi.reshape(-1, 1), precision=hi) + bpsi)
    out = xcl * psi
    return jnp.transpose(out, (0, 3, 1, 2))


def make_params(key, F_g, F_l, F_int):
    ks = jax.random.split(key, 12)
    return {
        # 1x1 conv weights stored as (C_in, C_out)
        "w_g": jax.random.normal(ks[0], (F_g, F_int), jnp.float32) * 0.2,
        "b_g": jax.random.normal(ks[1], (F_int,), jnp.float32) * 0.1,
        "w_x": jax.random.normal(ks[2], (F_l, F_int), jnp.float32) * 0.2,
        "b_x": jax.random.normal(ks[3], (F_int,), jnp.float32) * 0.1,
        "w_psi": jax.random.normal(ks[4], (F_int, 1), jnp.float32) * 0.2,
        "b_psi": jax.random.normal(ks[5], (1,), jnp.float32) * 0.1,
        # BatchNorm (inference) params
        "bn_g_gamma": 1.0 + 0.1 * jax.random.normal(ks[6], (F_int,), jnp.float32),
        "bn_g_beta": 0.1 * jax.random.normal(ks[7], (F_int,), jnp.float32),
        "bn_g_mean": 0.05 * jax.random.normal(ks[8], (F_int,), jnp.float32),
        "bn_g_var": jnp.abs(1.0 + 0.1 * jax.random.normal(ks[9], (F_int,), jnp.float32)),
        "bn_x_gamma": 1.0 + 0.1 * jax.random.normal(ks[10], (F_int,), jnp.float32),
        "bn_x_beta": 0.1 * jax.random.normal(ks[11], (F_int,), jnp.float32),
        "bn_x_mean": jnp.zeros((F_int,), jnp.float32),
        "bn_x_var": jnp.ones((F_int,), jnp.float32),
        "bn_p_gamma": jnp.ones((1,), jnp.float32),
        "bn_p_beta": jnp.zeros((1,), jnp.float32),
        "bn_p_mean": jnp.zeros((1,), jnp.float32),
        "bn_p_var": jnp.ones((1,), jnp.float32),
    }


if __name__ == "__main__":
    key = jax.random.PRNGKey(0)
    kg, kx, kp, kg2, kx2, kp2 = jax.random.split(key, 6)

    # ---- attention1 of the resnet34 config (F_g=32, F_l=64, F_int=32) -------
    N, F_g, F_l, F_int, H, W = 2, 32, 64, 32, 16, 16
    g = jax.random.normal(kg, (N, F_g, H, W), jnp.float32)
    x = jax.random.normal(kx, (N, F_l, H, W), jnp.float32)
    params = make_params(kp, F_g, F_l, F_int)

    out = jax.block_until_ready(attention_gate(g, x, params))
    ref = jax.block_until_ready(attention_gate_ref(g, x, params))
    assert out.shape == (N, F_l, H, W)
    assert jnp.allclose(out, ref, atol=1e-4, rtol=1e-4), "f32 mismatch vs reference"

    # ---- bf16 I/O path (f32 accumulation inside the kernel) -----------------
    g_bf = g.astype(jnp.bfloat16)
    x_bf = x.astype(jnp.bfloat16)
    out_bf = jax.block_until_ready(attention_gate(g_bf, x_bf, params))
    ref_bf = attention_gate_ref(g_bf.astype(jnp.float32),
                                x_bf.astype(jnp.float32), params)
    assert out_bf.dtype == jnp.bfloat16
    assert jnp.allclose(out_bf.astype(jnp.float32), ref_bf,
                        atol=3e-2, rtol=3e-2), "bf16 mismatch vs reference"

    # ---- batch-blocked path (several images per grid step) ------------------
    N2, Fg2, Fl2, Fi2, H2, W2 = 8, 64, 64, 32, 16, 16
    g2 = jax.random.normal(kg2, (N2, Fg2, H2, W2), jnp.float32)
    x2 = jax.random.normal(kx2, (N2, Fl2, H2, W2), jnp.float32)
    params2 = make_params(kp2, Fg2, Fl2, Fi2)
    out2 = jax.block_until_ready(attention_gate(g2, x2, params2))
    ref2 = attention_gate_ref(g2, x2, params2)
    assert jnp.allclose(out2, ref2, atol=1e-4, rtol=1e-4), "batch-blocked mismatch"

    print("KERNEL_OK")
</pallas_src>

<mosaic_0001>
module attributes {stable_mosaic.version = 11 : i64} {
  func.func @attention_gate_kernel(%arg0: i32, %arg1: i32, %arg2: memref<1x32x256xf32, #tpu.memory_space<vmem>>, %arg3: memref<1x64x256xf32, #tpu.memory_space<vmem>>, %arg4: memref<32x32xf32, #tpu.memory_space<vmem>>, %arg5: memref<32x64xf32, #tpu.memory_space<vmem>>, %arg6: memref<32x1xf32, #tpu.memory_space<vmem>>, %arg7: memref<1x32xf32, #tpu.memory_space<vmem>>, %arg8: memref<1xf32, #tpu.memory_space<smem>>, %arg9: memref<1x64x256xf32, #tpu.memory_space<vmem>>) attributes {dimension_semantics = [#tpu.dimension_semantics<parallel>, #tpu.dimension_semantics<parallel>], iteration_bounds = array<i64: 2, 1>, scalar_prefetch = 0 : i64, scratch_operands = 0 : i64, tpu.core_type = #tpu.core_type<tc>, window_params = [{transform_indices = @transform_0, window_bounds = array<i64: 1, 32, 256>}, {transform_indices = @transform_1, window_bounds = array<i64: 1, 64, 256>}, {pipeline_mode = #tpu.pipeline_mode<synchronous>, transform_indices = @transform_2, window_bounds = array<i64: 32, 32>}, {pipeline_mode = #tpu.pipeline_mode<synchronous>, transform_indices = @transform_3, window_bounds = array<i64: 32, 64>}, {pipeline_mode = #tpu.pipeline_mode<synchronous>, transform_indices = @transform_4, window_bounds = array<i64: 32, 1>}, {pipeline_mode = #tpu.pipeline_mode<synchronous>, transform_indices = @transform_5, window_bounds = array<i64: 1, 32>}, {transform_indices = @transform_6, window_bounds = array<i64: 1>}, {transform_indices = @transform_7, window_bounds = array<i64: 1, 64, 256>}]} {
    %c0 = arith.constant 0 : index
    %c0_0 = arith.constant 0 : index
    %0 = vector.load %arg4[%c0, %c0_0] : memref<32x32xf32, #tpu.memory_space<vmem>>, vector<32x32xf32>
    %c0_1 = arith.constant 0 : index
    %c0_2 = arith.constant 0 : index
    %1 = vector.load %arg5[%c0_1, %c0_2] : memref<32x64xf32, #tpu.memory_space<vmem>>, vector<32x64xf32>
    %c0_3 = arith.constant 0 : index
    %c0_4 = arith.constant 0 : index
    %2 = vector.load %arg6[%c0_3, %c0_4] : memref<32x1xf32, #tpu.memory_space<vmem>>, vector<32x1xf32>
    %c0_5 = arith.constant 0 : index
    %c0_6 = arith.constant 0 : index
    %3 = vector.load %arg7[%c0_5, %c0_6] : memref<1x32xf32, #tpu.memory_space<vmem>>, vector<1x32xf32>
    %c0_7 = arith.constant 0 : index
    %4 = memref.load %arg8[%c0_7] : memref<1xf32, #tpu.memory_space<smem>>
    %c0_8 = arith.constant 0 : index
    %c0_9 = arith.constant 0 : index
    %c0_10 = arith.constant 0 : index
    %5 = vector.load %arg2[%c0_8, %c0_9, %c0_10] : memref<1x32x256xf32, #tpu.memory_space<vmem>>, vector<1x32x256xf32>
    %6 = vector.shape_cast %5 : vector<1x32x256xf32> to vector<32x256xf32>
    %c0_11 = arith.constant 0 : index
    %c0_12 = arith.constant 0 : index
    %c0_13 = arith.constant 0 : index
    %7 = vector.load %arg3[%c0_11, %c0_12, %c0_13] : memref<1x64x256xf32, #tpu.memory_space<vmem>>, vector<1x64x256xf32>
    %8 = vector.shape_cast %7 : vector<1x64x256xf32> to vector<64x256xf32>
    %cst = arith.constant dense<0.000000e+00> : vector<32x256xf32>
    %9 = tpu.matmul %0, %6, %cst {dimension_numbers = #tpu.dot_dimension_numbers<[1], [0], [0], [1], [0, 0, 1, 1], [], []>} : vector<32x32xf32>, vector<32x256xf32>, vector<32x256xf32> -> vector<32x256xf32>
    %cst_14 = arith.constant dense<0.000000e+00> : vector<32x256xf32>
    %10 = tpu.matmul %1, %8, %cst_14 {dimension_numbers = #tpu.dot_dimension_numbers<[1], [0], [0], [1], [0, 0, 1, 1], [], []>} : vector<32x64xf32>, vector<64x256xf32>, vector<32x256xf32> -> vector<32x256xf32>
    %11 = arith.addf %9, %10 : vector<32x256xf32>
    %12 = vector.broadcast %2 : vector<32x1xf32> to vector<32x256xf32>
    %13 = arith.addf %11, %12 : vector<32x256xf32>
    %cst_15 = arith.constant 0.000000e+00 : f32
    %14 = vector.broadcast %cst_15 : f32 to vector<32x256xf32>
    %15 = arith.maximumf %13, %14 : vector<32x256xf32>
    %cst_16 = arith.constant dense<0.000000e+00> : vector<1x256xf32>
    %16 = tpu.matmul %3, %15, %cst_16 {dimension_numbers = #tpu.dot_dimension_numbers<[1], [0], [0], [1], [0, 0, 1, 1], [], []>} : vector<1x32xf32>, vector<32x256xf32>, vector<1x256xf32> -> vector<1x256xf32>
    %17 = vector.broadcast %4 : f32 to vector<1x256xf32>
    %18 = arith.addf %16, %17 : vector<1x256xf32>
    %19 = arith.negf %18 : vector<1x256xf32>
    %20 = math.exp %19 : vector<1x256xf32>
    %cst_17 = arith.constant 1.000000e+00 : f32
    %21 = vector.broadcast %cst_17 : f32 to vector<1x256xf32>
    %22 = arith.addf %21, %20 : vector<1x256xf32>
    %23 = arith.divf %21, %22 : vector<1x256xf32>
    %24 = vector.broadcast %23 : vector<1x256xf32> to vector<64x256xf32>
    %25 = arith.mulf %8, %24 : vector<64x256xf32>
    %c0_18 = arith.constant 0 : index
    %c0_19 = arith.constant 0 : index
    %c0_20 = arith.constant 0 : index
    %26 = vector.load %arg9[%c0_18, %c0_19, %c0_20] : memref<1x64x256xf32, #tpu.memory_space<vmem>>, vector<1x64x256xf32>
    %27 = vector.shape_cast %26 : vector<1x64x256xf32> to vector<64x256xf32>
    %28 = vector.shape_cast %25 : vector<64x256xf32> to vector<1x64x256xf32>
    tpu.vector_store %arg9[%c0_18, %c0_19, %c0_20], %28 {strides = array<i32>} : memref<1x64x256xf32, #tpu.memory_space<vmem>>, vector<1x64x256xf32>,
    return
  }
  func.func @transform_0(%arg0: i32, %arg1: i32) -> (i32, i32, i32) {
    %c0_i32 = arith.constant 0 : i32
    %c0_i32_0 = arith.constant 0 : i32
    return %arg0, %c0_i32, %arg1 : i32, i32, i32
  }
  func.func @transform_1(%arg0: i32, %arg1: i32) -> (i32, i32, i32) {
    %c0_i32 = arith.constant 0 : i32
    %c0_i32_0 = arith.constant 0 : i32
    return %arg0, %c0_i32, %arg1 : i32, i32, i32
  }
  func.func @transform_2(%arg0: i32, %arg1: i32) -> (i32, i32) {
    %c0_i32 = arith.constant 0 : i32
    %c0_i32_0 = arith.constant 0 : i32
    %c0_i32_1 = arith.constant 0 : i32
    return %c0_i32, %c0_i32_0 : i32, i32
  }
  func.func @transform_3(%arg0: i32, %arg1: i32) -> (i32, i32) {
    %c0_i32 = arith.constant 0 : i32
    %c0_i32_0 = arith.constant 0 : i32
    %c0_i32_1 = arith.constant 0 : i32
    return %c0_i32, %c0_i32_0 : i32, i32
  }
  func.func @transform_4(%arg0: i32, %arg1: i32) -> (i32, i32) {
    %c0_i32 = arith.constant 0 : i32
    %c0_i32_0 = arith.constant 0 : i32
    %c0_i32_1 = arith.constant 0 : i32
    return %c0_i32, %c0_i32_0 : i32, i32
  }
  func.func @transform_5(%arg0: i32, %arg1: i32) -> (i32, i32) {
    %c0_i32 = arith.constant 0 : i32
    %c0_i32_0 = arith.constant 0 : i32
    %c0_i32_1 = arith.constant 0 : i32
    return %c0_i32, %c0_i32_0 : i32, i32
  }
  func.func @transform_6(%arg0: i32, %arg1: i32) -> i32 {
    %c0_i32 = arith.constant 0 : i32
    %c0_i32_0 = arith.constant 0 : i32
    return %c0_i32 : i32
  }
  func.func @transform_7(%arg0: i32, %arg1: i32) -> (i32, i32, i32) {
    %c0_i32 = arith.constant 0 : i32
    %c0_i32_0 = arith.constant 0 : i32
    return %arg0, %c0_i32, %arg1 : i32, i32, i32
  }
}

</mosaic_0001>

<llo_original>
// kernel: tpu_custom_call.1
$region0: #{tpu_custom_call.1}
  #allocation0 [shape = 'u32[]', space=smem, size = 0x4, offset = 0x4, fixed_abs, tag = 'smem constant byte address 0x4 - core index']
  #allocation1 [shape = 'u32[144,128]{1,0:T(1,128)}', space=vmem, size = 0x12000, scoped, tag = 'internal scratch']
  #allocation2 [shape = 'f32[1]{0:T(128)S(6)}', space=smem, size = 0x200, scoped, tag = 'scoped memory for tpu_custom_call.1']
  %s0 = inlined_call_operand.hbm [shape: f32[2,32,256], index: 0, kind: input, shape index: {}]
  %s1 = inlined_call_operand.hbm [shape: f32[2,64,256], index: 1, kind: input, shape index: {}]
  %s2 = inlined_call_operand.vmem [shape: f32[32,32], index: 2, kind: input, shape index: {}]
  %s3 = inlined_call_operand.hbm [shape: f32[32,64], index: 3, kind: input, shape index: {}]
  %s4 = inlined_call_operand.vmem [shape: f32[32,1], index: 4, kind: input, shape index: {}]
  %s5 = inlined_call_operand.vmem [shape: f32[1,32], index: 5, kind: input, shape index: {}]
  %s6 = inlined_call_operand.<no memory space> [shape: f32[1], index: 6, kind: input, shape index: {}]
  %s7 = inlined_call_operand.hbm [shape: f32[2,64,256], index: 7, kind: output, shape index: {}]
  %s8 = sld [smem:[#allocation0]]
  $region73: #{tpu_custom_call.1} parent=0
    _
  %s10 = ssub.s32 1, %s8
  %s11 = scalar_select 0, %s10, %s8
  %12 = sst [smem:[#allocation2]] %s6
  $region1: #{tpu_custom_call.1} parent=0
    #allocation3 [shape = 'u8[65536]{0}', space=vmem, size = 0x10000, scoped, tag = 'input window, operand 0']
    #allocation4 [shape = 's32[2]{0}', space=sflag, size = 0x8, scoped, tag = 'scoped memory for tpu_custom_call.1']
    #allocation5 [shape = 's32[2]{0}', space=sflag, size = 0x8, scoped, tag = 'scoped memory for tpu_custom_call.1']
    #allocation6 [shape = 'u8[131072]{0}', space=vmem, size = 0x20000, scoped, tag = 'input window, operand 1']
    #allocation7 [shape = 's32[2]{0}', space=sflag, size = 0x8, scoped, tag = 'scoped memory for tpu_custom_call.1']
    #allocation8 [shape = 'u8[16384]{0}', space=vmem, size = 0x4000, scoped, tag = 'input window, operand 3, single buffered']
    #allocation9 [shape = 'u8[131072]{0}', space=vmem, size = 0x20000, scoped, tag = 'output window, operand 0']
    %13 = vsyncpa [#allocation4], 0
    %s14 = scalar_lea.sflag [#allocation4], 1
    %15 = vsyncpa %s14, 0
    %16 = vsyncpa [#allocation7], 0
    %s17 = scalar_lea.sflag [#allocation7], 1
    %18 = vsyncpa %s17, 0
    %19 = vsyncpa [#allocation5], 0
    %s20 = scalar_lea.sflag [#allocation5], 1
    %21 = vsyncpa %s20, 0
    loop: start=0, step=1, limit=4
    $region2: #{tpu_custom_call.1} parent=1 // loop_pre_header
      _
    $region3: #{tpu_custom_call.1} parent=1 // loop_header
      %s23 = sphi 0, %s27
      %p24 = scmp.ge.s32.totalorder %s23, 4
      %s30 = sphi 0, %s42
      %s31 = sphi 0, %s38
      %s32 = sphi 0, %s30
      %s33 = sphi 0, %s31
      %s34 = sphi 0, %s32
      %s35 = sphi 0, %s33
      %s47 = sphi 0, %s49
      %s50 = sphi 0, %s47
      %s51 = sphi 0, %s50
      %s67 = sphi 0, %s51
      %s75 = sphi 0, %s77
      %s78 = sphi 0, %s75
      %s79 = sphi 0, %s78
      %s95 = sphi 0, %s79
      %s99 = sphi 0, %s99
      %s101 = sphi 0, %s99
      %s102 = sphi 0, %s101
      %s116 = sphi 0, %s102
      %s120 = sphi 0, %s120
      %s122 = sphi 0, %s120
      %s123 = sphi 0, %s122
      %s137 = sphi 0, %s123
      %s141 = sphi 0, %s141
      %s143 = sphi 0, %s141
      %s144 = sphi 0, %s143
      %s158 = sphi 0, %s144
      %s162 = sphi 0, %s162
      %s164 = sphi 0, %s162
      %s165 = sphi 0, %s164
      %s179 = sphi 0, %s165
      %s183 = sphi 0, %s183
      %s185 = sphi 0, %s183
      %s186 = sphi 0, %s185
      %s200 = sphi 0, %s186
      %s208 = sphi 0, %s210
      %s211 = sphi 0, %s208
      %s212 = sphi 0, %s211
      %s228 = sphi 0, %s212
    $region4: #{tpu_custom_call.1} parent=1 // loop_header_branch
      %26 = sbr.rel (%p24) target = $region8
    $region5: #{tpu_custom_call.1} parent=1 // loop_body
      %s28 = ssub.s32 %s23, 1
      %s29 = ssub.s32 %s23, 2
      %s36 = sadd.s32 1, %s31
      %p37 = scmp.ge.s32.totalorder %s36, 1
      %s38 = scalar_select %p37, 0, %s36
      %s39 = sadd.s32 1, %s30
      %s40 = scalar_select %p37, %s39, %s30
      %p41 = scmp.ge.s32.totalorder %s40, 2
      %s42 = scalar_select %p41, 0, %s40
      %s43 = ssub.s32 %s30, %s42
      %s44 = ssub.s32 %s31, %s38
      %s45 = sor.u32 %s43, %s44
      %p46 = scmp.eq.s32.totalorder %s45, 0
      %s48 = sadd.s32 %s47, 1
      %s49 = scalar_select %p46, %s47, %s48
      %p52 = pneg %p46
      %p53 = scmp.eq.s32.totalorder %s23, 1
      %p54 = por %p52, %p53
      %p55 = scmp.ne.s32.totalorder %s47, %s50
      %p56 = scmp.eq.s32.totalorder %s23, 0
      %p57 = por %p55, %p56
      %p58 = scmp.ne.s32.totalorder %s47, %s50
      %p59 = scmp.eq.s32.totalorder %s28, 1
      %p60 = por %p58, %p59
      %p61 = scmp.ne.s32.totalorder %s50, %s51
      %p62 = scmp.eq.s32.totalorder %s28, 0
      %p63 = por %p61, %p62
      %p64 = scmp.ne.s32.totalorder %s50, %s51
      %p65 = scmp.eq.s32.totalorder %s29, 1
      %p66 = por %p64, %p65
      %p68 = scmp.ne.s32.totalorder %s51, %s67
      %p69 = scmp.eq.s32.totalorder %s29, 0
      %p70 = por %p68, %p69
      %s71 = ssub.s32 %s30, %s42
      %s72 = ssub.s32 %s31, %s38
      %s73 = sor.u32 %s71, %s72
      %p74 = scmp.eq.s32.totalorder %s73, 0
      %s76 = sadd.s32 %s75, 1
      %s77 = scalar_select %p74, %s75, %s76
      %p80 = pneg %p74
      %p81 = scmp.eq.s32.totalorder %s23, 1
      %p82 = por %p80, %p81
      %p83 = scmp.ne.s32.totalorder %s75, %s78
      %p84 = scmp.eq.s32.totalorder %s23, 0
      %p85 = por %p83, %p84
      %p86 = scmp.ne.s32.totalorder %s75, %s78
      %p87 = scmp.eq.s32.totalorder %s28, 1
      %p88 = por %p86, %p87
      %p89 = scmp.ne.s32.totalorder %s78, %s79
      %p90 = scmp.eq.s32.totalorder %s28, 0
      %p91 = por %p89, %p90
      %p92 = scmp.ne.s32.totalorder %s78, %s79
      %p93 = scmp.eq.s32.totalorder %s29, 1
      %p94 = por %p92, %p93
      %p96 = scmp.ne.s32.totalorder %s79, %s95
      %p97 = scmp.eq.s32.totalorder %s29, 0
      %p98 = por %p96, %p97
      %s100 = sadd.s32 %s99, 1
      %p103 = scmp.eq.s32.totalorder %s23, 1
      %p104 = scmp.ne.s32.totalorder %s99, %s101
      %p105 = scmp.eq.s32.totalorder %s23, 0
      %p106 = por %p104, %p105
      %p107 = scmp.ne.s32.totalorder %s99, %s101
      %p108 = scmp.eq.s32.totalorder %s28, 1
      %p109 = por %p107, %p108
      %p110 = scmp.ne.s32.totalorder %s101, %s102
      %p111 = scmp.eq.s32.totalorder %s28, 0
      %p112 = por %p110, %p111
      %p113 = scmp.ne.s32.totalorder %s101, %s102
      %p114 = scmp.eq.s32.totalorder %s29, 1
      %p115 = por %p113, %p114
      %p117 = scmp.ne.s32.totalorder %s102, %s116
      %p118 = scmp.eq.s32.totalorder %s29, 0
      %p119 = por %p117, %p118
      %s121 = sadd.s32 %s120, 1
      %p124 = scmp.eq.s32.totalorder %s23, 1
      %p125 = scmp.ne.s32.totalorder %s120, %s122
      %p126 = scmp.eq.s32.totalorder %s23, 0
      %p127 = por %p125, %p126
      %p128 = scmp.ne.s32.totalorder %s120, %s122
      %p129 = scmp.eq.s32.totalorder %s28, 1
      %p130 = por %p128, %p129
      %p131 = scmp.ne.s32.totalorder %s122, %s123
      %p132 = scmp.eq.s32.totalorder %s28, 0
      %p133 = por %p131, %p132
      %p134 = scmp.ne.s32.totalorder %s122, %s123
      %p135 = scmp.eq.s32.totalorder %s29, 1
      %p136 = por %p134, %p135
      %p138 = scmp.ne.s32.totalorder %s123, %s137
      %p139 = scmp.eq.s32.totalorder %s29, 0
      %p140 = por %p138, %p139
      %s142 = sadd.s32 %s141, 1
      %p145 = scmp.eq.s32.totalorder %s23, 1
      %p146 = scmp.ne.s32.totalorder %s141, %s143
      %p147 = scmp.eq.s32.totalorder %s23, 0
      %p148 = por %p146, %p147
      %p149 = scmp.ne.s32.totalorder %s141, %s143
      %p150 = scmp.eq.s32.totalorder %s28, 1
      %p151 = por %p149, %p150
      %p152 = scmp.ne.s32.totalorder %s143, %s144
      %p153 = scmp.eq.s32.totalorder %s28, 0
      %p154 = por %p152, %p153
      %p155 = scmp.ne.s32.totalorder %s143, %s144
      %p156 = scmp.eq.s32.totalorder %s29, 1
      %p157 = por %p155, %p156
      %p159 = scmp.ne.s32.totalorder %s144, %s158
      %p160 = scmp.eq.s32.totalorder %s29, 0
      %p161 = por %p159, %p160
      %s163 = sadd.s32 %s162, 1
      %p166 = scmp.eq.s32.totalorder %s23, 1
      %p167 = scmp.ne.s32.totalorder %s162, %s164
      %p168 = scmp.eq.s32.totalorder %s23, 0
      %p169 = por %p167, %p168
      %p170 = scmp.ne.s32.totalorder %s162, %s164
      %p171 = scmp.eq.s32.totalorder %s28, 1
      %p172 = por %p170, %p171
      %p173 = scmp.ne.s32.totalorder %s164, %s165
      %p174 = scmp.eq.s32.totalorder %s28, 0
      %p175 = por %p173, %p174
      %p176 = scmp.ne.s32.totalorder %s164, %s165
      %p177 = scmp.eq.s32.totalorder %s29, 1
      %p178 = por %p176, %p177
      %p180 = scmp.ne.s32.totalorder %s165, %s179
      %p181 = scmp.eq.s32.totalorder %s29, 0
      %p182 = por %p180, %p181
      %s184 = sadd.s32 %s183, 1
      %p187 = scmp.eq.s32.totalorder %s23, 1
      %p188 = scmp.ne.s32.totalorder %s183, %s185
      %p189 = scmp.eq.s32.totalorder %s23, 0
      %p190 = por %p188, %p189
      %p191 = scmp.ne.s32.totalorder %s183, %s185
      %p192 = scmp.eq.s32.totalorder %s28, 1
      %p193 = por %p191, %p192
      %p194 = scmp.ne.s32.totalorder %s185, %s186
      %p195 = scmp.eq.s32.totalorder %s28, 0
      %p196 = por %p194, %p195
      %p197 = scmp.ne.s32.totalorder %s185, %s186
      %p198 = scmp.eq.s32.totalorder %s29, 1
      %p199 = por %p197, %p198
      %p201 = scmp.ne.s32.totalorder %s186, %s200
      %p202 = scmp.eq.s32.totalorder %s29, 0
      %p203 = por %p201, %p202
      %s204 = ssub.s32 %s30, %s42
      %s205 = ssub.s32 %s31, %s38
      %s206 = sor.u32 %s204, %s205
      %p207 = scmp.eq.s32.totalorder %s206, 0
      %s209 = sadd.s32 %s208, 1
      %s210 = scalar_select %p207, %s208, %s209
      %p213 = pneg %p207
      %p214 = scmp.eq.s32.totalorder %s23, 1
      %p215 = por %p213, %p214
      %p216 = scmp.ne.s32.totalorder %s208, %s211
      %p217 = scmp.eq.s32.totalorder %s23, 0
      %p218 = por %p216, %p217
      %p219 = scmp.ne.s32.totalorder %s208, %s211
      %p220 = scmp.eq.s32.totalorder %s28, 1
      %p221 = por %p219, %p220
      %p222 = scmp.ne.s32.totalorder %s211, %s212
      %p223 = scmp.eq.s32.totalorder %s28, 0
      %p224 = por %p222, %p223
      %p225 = scmp.ne.s32.totalorder %s211, %s212
      %p226 = scmp.eq.s32.totalorder %s29, 1
      %p227 = por %p225, %p226
      %p229 = scmp.ne.s32.totalorder %s212, %s228
      %p230 = scmp.eq.s32.totalorder %s29, 0
      %p231 = por %p229, %p230
      %p232 = scmp.le.s32.totalorder 1, %s23
      %p233 = scmp.lt.s32.totalorder %s23, 3
      %p234 = pnand %p232, %p233
      %p235 = pneg %p234
      // Predicated region
      $region9: #{tpu_custom_call.1} parent=5 // pred_check
        _
      $region10: #{tpu_custom_call.1} parent=5 // pred_check_branch
        %237 = sbr.rel (%p234) target = $region12
      $region11: #{tpu_custom_call.1} parent=5 // pred_region
        %s238 = ssub.s32 %s23, 1
        // Predicated region
        $region13: #{tpu_custom_call.1} parent=11 // pred_check
          %p239 = pneg %p112
        $region14: #{tpu_custom_call.1} parent=11 // pred_check_branch
          %241 = sbr.rel (%p239) target = $region16
        $region15: #{tpu_custom_call.1} parent=11 // pred_region
          _
        $region16: #{tpu_custom_call.1} parent=11 // pred_fallthru
          _
        // Predicated region
        $region17: #{tpu_custom_call.1} parent=11 // pred_check
          %p242 = pneg %p133
        $region18: #{tpu_custom_call.1} parent=11 // pred_check_branch
          %244 = sbr.rel (%p242) target = $region20
        $region19: #{tpu_custom_call.1} parent=11 // pred_region
          %s246 = ssub.s32 512, 512
          %247 = vsyncadd [#allocation7], %s246
          %s248 = sshll.u32 [#allocation8], 4
          %s249 = int_to_ptr.vmem [resolvable:$true] %s248
          %254 = dma.hbm_to_vmem [thread:$0]  %s3, 512, %s249, [#allocation7], 128, 128, 8
        $region20: #{tpu_custom_call.1} parent=11 // pred_fallthru
          _
        // Predicated region
        $region21: #{tpu_custom_call.1} parent=11 // pred_check
          %p255 = pneg %p154
        $region22: #{tpu_custom_call.1} parent=11 // pred_check_branch
          %257 = sbr.rel (%p255) target = $region24
        $region23: #{tpu_custom_call.1} parent=11 // pred_region
          _
        $region24: #{tpu_custom_call.1} parent=11 // pred_fallthru
          _
        // Predicated region
        $region25: #{tpu_custom_call.1} parent=11 // pred_check
          %p258 = pneg %p175
        $region26: #{tpu_custom_call.1} parent=11 // pred_check_branch
          %260 = sbr.rel (%p258) target = $region28
        $region27: #{tpu_custom_call.1} parent=11 // pred_region
          _
        $region28: #{tpu_custom_call.1} parent=11 // pred_fallthru
          _
        // Predicated region
        $region29: #{tpu_custom_call.1} parent=11 // pred_check
          %p261 = pneg %p196
        $region30: #{tpu_custom_call.1} parent=11 // pred_check_branch
          %263 = sbr.rel (%p261) target = $region32
        $region31: #{tpu_custom_call.1} parent=11 // pred_region
          _
        $region32: #{tpu_custom_call.1} parent=11 // pred_fallthru
          _
      $region12: #{tpu_custom_call.1} parent=5 // pred_fallthru
        _
      %p264 = scmp.lt.s32.totalorder %s23, 2
      // Predicated region
      $region33: #{tpu_custom_call.1} parent=5 // pred_check
        %p265 = pneg %p264
      $region34: #{tpu_custom_call.1} parent=5 // pred_check_branch
        %267 = sbr.rel (%p265) target = $region36
      $region35: #{tpu_custom_call.1} parent=5 // pred_region
        // Predicated region
        $region37: #{tpu_custom_call.1} parent=35 // pred_check
          %p268 = pneg %p57
        $region38: #{tpu_custom_call.1} parent=35 // pred_check_branch
          %270 = sbr.rel (%p268) target = $region40
        $region39: #{tpu_custom_call.1} parent=35 // pred_region
          %s271 = sand.u32 %s47, 1
          %s272 = scalar_lea.sflag [#allocation4], %s271
          %s273 = sand.u32 %s47, 1
          %s274 = smul.addr %s273, 64
          %s275 = scalar_lea.vmem [#allocation3], %s274
          %s276 = smul.u32 2, %s31
          %s278 = ssub.s32 1024, 1024
          %279 = vsyncadd %s272, %s278
          %s280 = smul.addr %s30, 8
          %s281 = sadd.s32 %s276, %s280
          %s282 = smul.addr %s281, 128
          %s283 = scalar_lea.hbm %s0, %s282
          %s284 = sshll.u32 %s275, 4
          %s285 = int_to_ptr.vmem [resolvable:$true] %s284
          %290 = dma.hbm_to_vmem [thread:$0]  %s283, 1024, %s285, %s272, 256, 256, 16
        $region40: #{tpu_custom_call.1} parent=35 // pred_fallthru
          _
        // Predicated region
        $region41: #{tpu_custom_call.1} parent=35 // pred_check
          %p291 = pneg %p85
        $region42: #{tpu_custom_call.1} parent=35 // pred_check_branch
          %293 = sbr.rel (%p291) target = $region44
        $region43: #{tpu_custom_call.1} parent=35 // pred_region
          %s294 = sand.u32 %s23, 1
          %s295 = scalar_lea.sflag [#allocation7], %s294
          %s296 = sand.u32 %s75, 1
          %s297 = smul.addr %s296, 128
          %s298 = scalar_lea.vmem [#allocation6], %s297
          %s299 = smul.u32 2, %s31
          %s301 = ssub.s32 2048, 2048
          %302 = vsyncadd %s295, %s301
          %s303 = smul.addr %s30, 16
          %s304 = sadd.s32 %s299, %s303
          %s305 = smul.addr %s304, 128
          %s306 = scalar_lea.hbm %s1, %s305
          %s307 = sshll.u32 %s298, 4
          %s308 = int_to_ptr.vmem [resolvable:$true] %s307
          %313 = dma.hbm_to_vmem [thread:$0]  %s306, 2048, %s308, %s295, 256, 256, 16
        $region44: #{tpu_custom_call.1} parent=35 // pred_fallthru
          _
      $region36: #{tpu_custom_call.1} parent=5 // pred_fallthru
        _
      %p314 = scmp.le.s32.totalorder 1, %s23
      %p315 = scmp.lt.s32.totalorder %s23, 3
      %p316 = pnand %p314, %p315
      %p317 = pneg %p316
      // Predicated region
      $region45: #{tpu_custom_call.1} parent=5 // pred_check
        _
      $region46: #{tpu_custom_call.1} parent=5 // pred_check_branch
        %319 = sbr.rel (%p316) target = $region48
      $region47: #{tpu_custom_call.1} parent=5 // pred_region
        %s320 = ssub.s32 %s23, 1
        %s321 = sand.u32 %s50, 1
        %s322 = scalar_lea.sflag [#allocation4], %s321
        %s323 = sand.u32 %s50, 1
        %s324 = smul.addr %s323, 64
        %s325 = scalar_lea.vmem [#allocation3], %s324
        // Predicated region
        $region49: #{tpu_custom_call.1} parent=47 // pred_check
          %p326 = pneg %p63
        $region50: #{tpu_custom_call.1} parent=47 // pred_check_branch
          %328 = sbr.rel (%p326) target = $region52
        $region51: #{tpu_custom_call.1} parent=47 // pred_region
          %329 = dma.done %s322, 1024
        $region52: #{tpu_custom_call.1} parent=47 // pred_fallthru
          _
        %s330 = sand.u32 %s28, 1
        %s331 = scalar_lea.sflag [#allocation7], %s330
        %s332 = sand.u32 %s78, 1
        %s333 = smul.addr %s332, 128
        %s334 = scalar_lea.vmem [#allocation6], %s333
        // Predicated region
        $region53: #{tpu_custom_call.1} parent=47 // pred_check
          %p335 = pneg %p91
        $region54: #{tpu_custom_call.1} parent=47 // pred_check_branch
          %337 = sbr.rel (%p335) target = $region56
        $region55: #{tpu_custom_call.1} parent=47 // pred_region
          %338 = dma.done %s331, 2048
        $region56: #{tpu_custom_call.1} parent=47 // pred_fallthru
          _
        // Predicated region
        $region57: #{tpu_custom_call.1} parent=47 // pred_check
          %p339 = pneg %p133
        $region58: #{tpu_custom_call.1} parent=47 // pred_check_branch
          %341 = sbr.rel (%p339) target = $region60
        $region59: #{tpu_custom_call.1} parent=47 // pred_region
          %342 = dma.done [#allocation7], 512
        $region60: #{tpu_custom_call.1} parent=47 // pred_fallthru
          _
        %s343 = sand.u32 %s50, 1
        %s344 = scalar_lea.sflag [#allocation4], %s343
        %s345 = sand.u32 %s50, 1
        %s346 = smul.addr %s345, 64
        %s347 = scalar_lea.vmem [#allocation3], %s346
        %p348 = pneg %p63
        %p349 = pneg %p60
        %s350 = sand.u32 %s28, 1
        %s351 = scalar_lea.sflag [#allocation7], %s350
        %s352 = sand.u32 %s78, 1
        %s353 = smul.addr %s352, 128
        %s354 = scalar_lea.vmem [#allocation6], %s353
        %p355 = pneg %p91
        %p356 = pneg %p88
        %p357 = pneg %p112
        %p358 = pneg %p109
        %p359 = pneg %p133
        %p360 = pneg %p130
        %p361 = pneg %p154
        %p362 = pneg %p151
        %p363 = pneg %p175
        %p364 = pneg %p172
        %p365 = pneg %p196
        %p366 = pneg %p193
        %p367 = pneg %p224
        %p368 = pneg %p221
        %s369 = sand.u32 %s211, 1
        %s370 = scalar_lea.sflag [#allocation5], %s369
        %s371 = sand.u32 %s211, 1
        %s372 = smul.addr %s371, 128
        %s373 = scalar_lea.vmem [#allocation9], %s372
        %s374 = smul.u32 2, %s33
        %s375 = smul.u32 2, %s33
        %s376 = smul.u32 2, %s33
        %v377 = vld [vmem:[%s2] sm:$0xff]
        %v378 = vld [vmem:[%s2 + $0x8] sm:$0xff]
        %v379 = vld [vmem:[%s2 + $0x10] sm:$0xff]
        %v380 = vld [vmem:[%s2 + $0x18] sm:$0xff]
        %v381 = vld [vmem:[#allocation8] sm:$0xff]
        %v382 = vld [vmem:[#allocation8 + $0x8] sm:$0xff]
        %v383 = vld [vmem:[#allocation8 + $0x10] sm:$0xff]
        %v384 = vld [vmem:[#allocation8 + $0x18] sm:$0xff]
        %v385 = vld [vmem:[%s4] sm:$0xff]
        %v386 = vld [vmem:[%s4 + $0x8] sm:$0xff]
        %v387 = vld [vmem:[%s4 + $0x10] sm:$0xff]
        %v388 = vld [vmem:[%s4 + $0x18] sm:$0xff]
        %v389 = vld [vmem:[%s5] sm:$0x1]
        %s390 = sld [smem:[#allocation2]]
        %v391 = vld [vmem:[%s325] sm:$0xff]
        %v392 = vld [vmem:[%s325 + $0x8] sm:$0xff]
        %v393 = vld [vmem:[%s325 + $0x10] sm:$0xff]
        %v394 = vld [vmem:[%s325 + $0x18] sm:$0xff]
        %v395 = vld [vmem:[%s325 + $0x20] sm:$0xff]
        %v396 = vld [vmem:[%s325 + $0x28] sm:$0xff]
        %v397 = vld [vmem:[%s325 + $0x30] sm:$0xff]
        %v398 = vld [vmem:[%s325 + $0x38] sm:$0xff]
        %v399 = vld [vmem:[%s334] sm:$0xff]
        %v400 = vld [vmem:[%s334 + $0x8] sm:$0xff]
        %v401 = vld [vmem:[%s334 + $0x10] sm:$0xff]
        %v402 = vld [vmem:[%s334 + $0x18] sm:$0xff]
        %v403 = vld [vmem:[%s334 + $0x20] sm:$0xff]
        %v404 = vld [vmem:[%s334 + $0x28] sm:$0xff]
        %v405 = vld [vmem:[%s334 + $0x30] sm:$0xff]
        %v406 = vld [vmem:[%s334 + $0x38] sm:$0xff]
        %v407 = vld [vmem:[%s334 + $0x40] sm:$0xff]
        %v408 = vld [vmem:[%s334 + $0x48] sm:$0xff]
        %v409 = vld [vmem:[%s334 + $0x50] sm:$0xff]
        %v410 = vld [vmem:[%s334 + $0x58] sm:$0xff]
        %v411 = vld [vmem:[%s334 + $0x60] sm:$0xff]
        %v412 = vld [vmem:[%s334 + $0x68] sm:$0xff]
        %v413 = vld [vmem:[%s334 + $0x70] sm:$0xff]
        %v414 = vld [vmem:[%s334 + $0x78] sm:$0xff]
        %vm415 = vcmask 523264
        %v417 = vsel %vm415, %v381, 0
        %v420 = vsel %vm415, %v382, 0
        %v423 = vsel %vm415, %v383, 0
        %v426 = vsel %vm415, %v384, 0
        %428 = vmatprep.subr.mxu0 %v400
        %429 = vmatpush1.msra.mxu0 %v399
        %430 = vmatprep.subr.mxu0 %v402
        %431 = vmatpush1.msra.mxu0 %v401
        %432 = vmatprep.subr.mxu0 %v404
        %433 = vmatpush1.msra.mxu0 %v403
        %434 = vmatprep.subr.mxu0 %v406
        %435 = vmatpush1.msra.mxu0 %v405
        %436 = vmatprep.subr.mxu0 %v408
        %437 = vmatpush1.msra.mxu0 %v407
        %438 = vmatprep.subr.mxu0 %v410
        %439 = vmatpush1.msra.mxu0 %v409
        %440 = vmatprep.subr.mxu0 %v412
        %441 = vmatpush1.msra.mxu0 %v411
        %442 = vmatprep.subr.mxu0 %v414
        %443 = vmatpush1.msra.mxu0 %v413
        %444 = vmatprep.subr.mxu0 0.0
        %445 = vmatpush1.msra.mxu0 0.0
        %446 = vmatprep.subr.mxu0 0.0
        %447 = vmatpush1.msra.mxu0 0.0
        %448 = vmatprep.subr.mxu0 0.0
        %449 = vmatpush1.msra.mxu0 0.0
        %450 = vmatprep.subr.mxu0 0.0
        %451 = vmatpush1.msra.mxu0 0.0
        %452 = vmatprep.subr.mxu0 0.0
        %453 = vmatpush1.msra.mxu0 0.0
        %454 = vmatprep.subr.mxu0 0.0
        %455 = vmatpush1.msra.mxu0 0.0
        %456 = vmatprep.subr.mxu0 0.0
        %457 = vmatpush1.msra.mxu0 0.0
        %458 = vmatprep.subr.mxu0 0.0
        %459 = vmatpush1.msra.mxu0 0.0
        %460 = vmatprep.subr.mxu0 0.0
        %461 = vmatpush1.msra.mxu0 0.0
        %462 = vmatprep.subr.mxu0 0.0
        %463 = vmatpush1.msra.mxu0 0.0
        %464 = vmatprep.subr.mxu0 0.0
        %465 = vmatpush1.msra.mxu0 0.0
        %466 = vmatprep.subr.mxu0 0.0
        %467 = vmatpush1.msra.mxu0 0.0
        %468 = vmatprep.subr.mxu0 0.0
        %469 = vmatpush1.msra.mxu0 0.0
        %470 = vmatprep.subr.mxu0 0.0
        %471 = vmatpush1.msra.mxu0 0.0
        %472 = vmatprep.subr.mxu0 0.0
        %473 = vmatpush1.msra.mxu0 0.0
        %474 = vmatprep.subr.mxu0 0.0
        %475 = vmatpush1.msra.mxu0 0.0
        %476 = vmatprep.subr.mxu0 0.0
        %477 = vmatpush1.msra.mxu0 0.0
        %478 = vmatprep.subr.mxu0 0.0
        %479 = vmatpush1.msra.mxu0 0.0
        %480 = vmatprep.subr.mxu0 0.0
        %481 = vmatpush1.msra.mxu0 0.0
        %482 = vmatprep.subr.mxu0 0.0
        %483 = vmatpush1.msra.mxu0 0.0
        %484 = vmatprep.subr.mxu0 0.0
        %485 = vmatpush1.msra.mxu0 0.0
        %486 = vmatprep.subr.mxu0 0.0
        %487 = vmatpush1.msra.mxu0 0.0
        %488 = vmatprep.subr.mxu0 0.0
        %489 = vmatpush1.msra.mxu0 0.0
        %490 = vmatprep.subr.mxu0 0.0
        %491 = vmatpush1.msra.mxu0 0.0
        %492 = vmatprep.mubr.f32.mxu0 0.0
        %493 = vmatmul.mubr.f32.gmra.mrb[0].mxu0 %v417
        %v494 = vpop.f32.mrb[0].mxu0
        %v495 = vadd.f32 0.0, %v494
        %v496 = vpop.f32.mrb[0].mxu0
        %v497 = vadd.f32 0.0, %v496
        %498 = vmatprep.mubr.f32.mxu0 0.0
        %499 = vmatmul.mubr.f32.gmra.mrb[0].mxu0 %v420
        %v500 = vpop.f32.mrb[0].mxu0
        %v501 = vadd.f32 0.0, %v500
        %v502 = vpop.f32.mrb[0].mxu0
        %v503 = vadd.f32 0.0, %v502
        %504 = vmatprep.mubr.f32.mxu0 0.0
        %505 = vmatmul.mubr.f32.gmra.mrb[0].mxu0 %v423
        %v506 = vpop.f32.mrb[0].mxu0
        %v507 = vadd.f32 0.0, %v506
        %v508 = vpop.f32.mrb[0].mxu0
        %v509 = vadd.f32 0.0, %v508
        %510 = vmatprep.mubr.f32.mxu0 0.0
        %511 = vmatmul.mubr.f32.gmra.mrb[0].mxu0 %v426
        %v512 = vpop.f32.mrb[0].mxu0
        %v513 = vadd.f32 0.0, %v512
        %v514 = vpop.f32.mrb[0].mxu0
        %v515 = vadd.f32 0.0, %v514
        %516 = vdwg.mxu0
        %vm517 = vcmask 261120
        %v519 = vsel %vm517, %v377, 0
        %v522 = vsel %vm517, %v378, 0
        %v525 = vsel %vm517, %v379, 0
        %v528 = vsel %vm517, %v380, 0
        %530 = vmatprep.subr.mxu0 %v392
        %531 = vmatpush1.msra.mxu0 %v391
        %532 = vmatprep.subr.mxu0 %v394
        %533 = vmatpush1.msra.mxu0 %v393
        %534 = vmatprep.subr.mxu0 %v396
        %535 = vmatpush1.msra.mxu0 %v395
        %536 = vmatprep.subr.mxu0 %v398
        %537 = vmatpush1.msra.mxu0 %v397
        %538 = vmatprep.subr.mxu0 0.0
        %539 = vmatpush1.msra.mxu0 0.0
        %540 = vmatprep.subr.mxu0 0.0
        %541 = vmatpush1.msra.mxu0 0.0
        %542 = vmatprep.subr.mxu0 0.0
        %543 = vmatpush1.msra.mxu0 0.0
        %544 = vmatprep.subr.mxu0 0.0
        %545 = vmatpush1.msra.mxu0 0.0
        %546 = vmatprep.subr.mxu0 0.0
        %547 = vmatpush1.msra.mxu0 0.0
        %548 = vmatprep.subr.mxu0 0.0
        %549 = vmatpush1.msra.mxu0 0.0
        %550 = vmatprep.subr.mxu0 0.0
        %551 = vmatpush1.msra.mxu0 0.0
        %552 = vmatprep.subr.mxu0 0.0
        %553 = vmatpush1.msra.mxu0 0.0
        %554 = vmatprep.subr.mxu0 0.0
        %555 = vmatpush1.msra.mxu0 0.0
        %556 = vmatprep.subr.mxu0 0.0
        %557 = vmatpush1.msra.mxu0 0.0
        %558 = vmatprep.subr.mxu0 0.0
        %559 = vmatpush1.msra.mxu0 0.0
        %560 = vmatprep.subr.mxu0 0.0
        %561 = vmatpush1.msra.mxu0 0.0
        %562 = vmatprep.subr.mxu0 0.0
        %563 = vmatpush1.msra.mxu0 0.0
        %564 = vmatprep.subr.mxu0 0.0
        %565 = vmatpush1.msra.mxu0 0.0
        %566 = vmatprep.subr.mxu0 0.0
        %567 = vmatpush1.msra.mxu0 0.0
        %568 = vmatprep.subr.mxu0 0.0
        %569 = vmatpush1.msra.mxu0 0.0
        %570 = vmatprep.subr.mxu0 0.0
        %571 = vmatpush1.msra.mxu0 0.0
        %572 = vmatprep.subr.mxu0 0.0
        %573 = vmatpush1.msra.mxu0 0.0
        %574 = vmatprep.subr.mxu0 0.0
        %575 = vmatpush1.msra.mxu0 0.0
        %576 = vmatprep.subr.mxu0 0.0
        %577 = vmatpush1.msra.mxu0 0.0
        %578 = vmatprep.subr.mxu0 0.0
        %579 = vmatpush1.msra.mxu0 0.0
        %580 = vmatprep.subr.mxu0 0.0
        %581 = vmatpush1.msra.mxu0 0.0
        %582 = vmatprep.subr.mxu0 0.0
        %583 = vmatpush1.msra.mxu0 0.0
        %584 = vmatprep.subr.mxu0 0.0
        %585 = vmatpush1.msra.mxu0 0.0
        %586 = vmatprep.subr.mxu0 0.0
        %587 = vmatpush1.msra.mxu0 0.0
        %588 = vmatprep.subr.mxu0 0.0
        %589 = vmatpush1.msra.mxu0 0.0
        %590 = vmatprep.subr.mxu0 0.0
        %591 = vmatpush1.msra.mxu0 0.0
        %592 = vmatprep.subr.mxu0 0.0
        %593 = vmatpush1.msra.mxu0 0.0
        %594 = vmatprep.mubr.f32.mxu0 0.0
        %595 = vmatmul.mubr.f32.gmra.mrb[0].mxu0 %v519
        %v596 = vpop.f32.mrb[0].mxu0
        %v597 = vadd.f32 %v495, %v596
        %v598 = vpop.f32.mrb[0].mxu0
        %v599 = vadd.f32 %v497, %v598
        %600 = vmatprep.mubr.f32.mxu0 0.0
        %601 = vmatmul.mubr.f32.gmra.mrb[0].mxu0 %v522
        %v602 = vpop.f32.mrb[0].mxu0
        %v603 = vadd.f32 %v501, %v602
        %v604 = vpop.f32.mrb[0].mxu0
        %v605 = vadd.f32 %v503, %v604
        %606 = vmatprep.mubr.f32.mxu0 0.0
        %607 = vmatmul.mubr.f32.gmra.mrb[0].mxu0 %v525
        %v608 = vpop.f32.mrb[0].mxu0
        %v609 = vadd.f32 %v507, %v608
        %v610 = vpop.f32.mrb[0].mxu0
        %v611 = vadd.f32 %v509, %v610
        %612 = vmatprep.mubr.f32.mxu0 0.0
        %613 = vmatmul.mubr.f32.gmra.mrb[0].mxu0 %v528
        %v614 = vpop.f32.mrb[0].mxu0
        %v615 = vadd.f32 %v513, %v614
        %v616 = vpop.f32.mrb[0].mxu0
        %v617 = vadd.f32 %v515, %v616
        %618 = vdwg.mxu0
        %620 = vset.pattern.permute.xlu0 0
        %621 = vperm.xlu0 %620, %v385
        %v622 = vpop.permute.xlu0 %621
        %625 = vset.pattern.permute.xlu0 0
        %626 = vperm.xlu0 %625, %v386
        %v627 = vpop.permute.xlu0 %626
        %630 = vset.pattern.permute.xlu0 0
        %631 = vperm.xlu0 %630, %v387
        %v632 = vpop.permute.xlu0 %631
        %635 = vset.pattern.permute.xlu0 0
        %636 = vperm.xlu0 %635, %v388
        %v637 = vpop.permute.xlu0 %636
        %v639 = vadd.f32 %v597, %v622
        %v640 = vadd.f32 %v599, %v622
        %v641 = vadd.f32 %v603, %v627
        %v642 = vadd.f32 %v605, %v627
        %v643 = vadd.f32 %v609, %v632
        %v644 = vadd.f32 %v611, %v632
        %v645 = vadd.f32 %v615, %v637
        %v646 = vadd.f32 %v617, %v637
        %v647 = vmax.f32 %v639, 0.0
        %v648 = vmax.f32 %v640, 0.0
        %v649 = vmax.f32 %v641, 0.0
        %v650 = vmax.f32 %v642, 0.0
        %v651 = vmax.f32 %v643, 0.0
        %v652 = vmax.f32 %v644, 0.0
        %v653 = vmax.f32 %v645, 0.0
        %v654 = vmax.f32 %v646, 0.0
        %v655 = vstv %s390
        %v657 = vsel %vm517, %v389, 0
        %659 = vmatprep.subr.mxu0 %v648
        %660 = vmatpush1.msra.mxu0 %v647
        %661 = vmatprep.subr.mxu0 %v650
        %662 = vmatpush1.msra.mxu0 %v649
        %663 = vmatprep.subr.mxu0 %v652
        %664 = vmatpush1.msra.mxu0 %v651
        %665 = vmatprep.subr.mxu0 %v654
        %666 = vmatpush1.msra.mxu0 %v653
        %667 = vmatprep.subr.mxu0 0.0
        %668 = vmatpush1.msra.mxu0 0.0
        %669 = vmatprep.subr.mxu0 0.0
        %670 = vmatpush1.msra.mxu0 0.0
        %671 = vmatprep.subr.mxu0 0.0
        %672 = vmatpush1.msra.mxu0 0.0
        %673 = vmatprep.subr.mxu0 0.0
        %674 = vmatpush1.msra.mxu0 0.0
        %675 = vmatprep.subr.mxu0 0.0
        %676 = vmatpush1.msra.mxu0 0.0
        %677 = vmatprep.subr.mxu0 0.0
        %678 = vmatpush1.msra.mxu0 0.0
        %679 = vmatprep.subr.mxu0 0.0
        %680 = vmatpush1.msra.mxu0 0.0
        %681 = vmatprep.subr.mxu0 0.0
        %682 = vmatpush1.msra.mxu0 0.0
        %683 = vmatprep.subr.mxu0 0.0
        %684 = vmatpush1.msra.mxu0 0.0
        %685 = vmatprep.subr.mxu0 0.0
        %686 = vmatpush1.msra.mxu0 0.0
        %687 = vmatprep.subr.mxu0 0.0
        %688 = vmatpush1.msra.mxu0 0.0
        %689 = vmatprep.subr.mxu0 0.0
        %690 = vmatpush1.msra.mxu0 0.0
        %691 = vmatprep.subr.mxu0 0.0
        %692 = vmatpush1.msra.mxu0 0.0
        %693 = vmatprep.subr.mxu0 0.0
        %694 = vmatpush1.msra.mxu0 0.0
        %695 = vmatprep.subr.mxu0 0.0
        %696 = vmatpush1.msra.mxu0 0.0
        %697 = vmatprep.subr.mxu0 0.0
        %698 = vmatpush1.msra.mxu0 0.0
        %699 = vmatprep.subr.mxu0 0.0
        %700 = vmatpush1.msra.mxu0 0.0
        %701 = vmatprep.subr.mxu0 0.0
        %702 = vmatpush1.msra.mxu0 0.0
        %703 = vmatprep.subr.mxu0 0.0
        %704 = vmatpush1.msra.mxu0 0.0
        %705 = vmatprep.subr.mxu0 0.0
        %706 = vmatpush1.msra.mxu0 0.0
        %707 = vmatprep.subr.mxu0 0.0
        %708 = vmatpush1.msra.mxu0 0.0
        %709 = vmatprep.subr.mxu0 0.0
        %710 = vmatpush1.msra.mxu0 0.0
        %711 = vmatprep.subr.mxu0 0.0
        %712 = vmatpush1.msra.mxu0 0.0
        %713 = vmatprep.subr.mxu0 0.0
        %714 = vmatpush1.msra.mxu0 0.0
        %715 = vmatprep.subr.mxu0 0.0
        %716 = vmatpush1.msra.mxu0 0.0
        %717 = vmatprep.subr.mxu0 0.0
        %718 = vmatpush1.msra.mxu0 0.0
        %719 = vmatprep.subr.mxu0 0.0
        %720 = vmatpush1.msra.mxu0 0.0
        %721 = vmatprep.subr.mxu0 0.0
        %722 = vmatpush1.msra.mxu0 0.0
        %723 = vmatprep.mubr.f32.mxu0 0.0
        %724 = vmatmul.mubr.f32.gmra.mrb[0].mxu0 %v657
        %v725 = vpop.f32.mrb[0].mxu0
        %v726 = vadd.f32 %v655, %v725
        %v727 = vpop.f32.mrb[0].mxu0
        %v728 = vadd.f32 %v655, %v727
        %729 = vdwg.mxu0
        %v730 = vxor.u32 %v726, 2147483648
        %v731 = vxor.u32 %v728, 2147483648
        %v732 = vmul.f32 %v730, 1.442695
        %v733 = vpow.pop %v732
        %v734 = vmul.f32 %v731, 1.442695
        %v735 = vpow.pop %v734
        %v736 = vadd.f32 %v733, 1.0
        %v737 = vadd.f32 %v735, 1.0
        %v738 = vrcp.pop %v736
        %v739 = vmul.f32 1.0, %v738
        %v740 = vrcp.pop %v737
        %v741 = vmul.f32 1.0, %v740
        %v742 = vlaneseq
        %v743 = vshrl.u32 %v742, 7
        %v744 = vsub.s32 0, %v743
        %v745 = vrot.slane %v739, %v744
        %v746 = vlaneseq
        %v747 = vshrl.u32 %v746, 7
        %v748 = vsub.s32 0, %v747
        %v749 = vrot.slane %v741, %v748
        %v750 = vmul.f32 %v399, %v745
        %v751 = vmul.f32 %v400, %v749
        %v752 = vmul.f32 %v401, %v745
        %v753 = vmul.f32 %v402, %v749
        %v754 = vmul.f32 %v403, %v745
        %v755 = vmul.f32 %v404, %v749
        %v756 = vmul.f32 %v405, %v745
        %v757 = vmul.f32 %v406, %v749
        %v758 = vmul.f32 %v407, %v745
        %v759 = vmul.f32 %v408, %v749
        %v760 = vmul.f32 %v409, %v745
        %v761 = vmul.f32 %v410, %v749
        %v762 = vmul.f32 %v411, %v745
        %v763 = vmul.f32 %v412, %v749
        %v764 = vmul.f32 %v413, %v745
        %v765 = vmul.f32 %v414, %v749
        %766 = vst [vmem:[%s373] sm:$0xff] %v750
        %767 = vst [vmem:[%s373 + $0x8] sm:$0xff] %v751
        %768 = vst [vmem:[%s373 + $0x10] sm:$0xff] %v752
        %769 = vst [vmem:[%s373 + $0x18] sm:$0xff] %v753
        %770 = vst [vmem:[%s373 + $0x20] sm:$0xff] %v754
        %771 = vst [vmem:[%s373 + $0x28] sm:$0xff] %v755
        %772 = vst [vmem:[%s373 + $0x30] sm:$0xff] %v756
        %773 = vst [vmem:[%s373 + $0x38] sm:$0xff] %v757
        %774 = vst [vmem:[%s373 + $0x40] sm:$0xff] %v758
        %775 = vst [vmem:[%s373 + $0x48] sm:$0xff] %v759
        %776 = vst [vmem:[%s373 + $0x50] sm:$0xff] %v760
        %777 = vst [vmem:[%s373 + $0x58] sm:$0xff] %v761
        %778 = vst [vmem:[%s373 + $0x60] sm:$0xff] %v762
        %779 = vst [vmem:[%s373 + $0x68] sm:$0xff] %v763
        %780 = vst [vmem:[%s373 + $0x70] sm:$0xff] %v764
        %781 = vst [vmem:[%s373 + $0x78] sm:$0xff] %v765
        %s782 = sand.u32 %s211, 1
        %s783 = scalar_lea.sflag [#allocation5], %s782
        %s784 = sand.u32 %s211, 1
        %s785 = smul.addr %s784, 128
        %s786 = scalar_lea.vmem [#allocation9], %s785
        // Predicated region
        $region61: #{tpu_custom_call.1} parent=47 // pred_check
          %p787 = pneg %p221
        $region62: #{tpu_custom_call.1} parent=47 // pred_check_branch
          %789 = sbr.rel (%p787) target = $region64
        $region63: #{tpu_custom_call.1} parent=47 // pred_region
          %s790 = smul.u32 2, %s33
          %s792 = ssub.s32 2048, 2048
          %793 = vsyncadd %s783, %s792
          %s794 = smul.addr %s32, 16
          %s795 = sadd.s32 %s790, %s794
          %s796 = smul.addr %s795, 128
          %s797 = scalar_lea.hbm %s7, %s796
          %s798 = sshll.u32 %s786, 4
          %s799 = int_to_ptr.vmem [resolvable:$true] %s798
          %804 = dma.vmem_to_hbm [thread:$0]  %s799, 2048, %s797, %s783, 256, 256, 16
        $region64: #{tpu_custom_call.1} parent=47 // pred_fallthru
          _
      $region48: #{tpu_custom_call.1} parent=5 // pred_fallthru
        _
      %p805 = scmp.le.s32.totalorder 2, %s23
      // Predicated region
      $region65: #{tpu_custom_call.1} parent=5 // pred_check
        %p806 = pneg %p805
      $region66: #{tpu_custom_call.1} parent=5 // pred_check_branch
        %808 = sbr.rel (%p806) target = $region68
      $region67: #{tpu_custom_call.1} parent=5 // pred_region
        %s809 = ssub.s32 %s23, 2
        // Predicated region
        $region69: #{tpu_custom_call.1} parent=67 // pred_check
          %p810 = pneg %p227
        $region70: #{tpu_custom_call.1} parent=67 // pred_check_branch
          %812 = sbr.rel (%p810) target = $region72
        $region71: #{tpu_custom_call.1} parent=67 // pred_region
          %s813 = sand.u32 %s212, 1
          %s814 = scalar_lea.sflag [#allocation5], %s813
          %s815 = sand.u32 %s212, 1
          %s816 = smul.addr %s815, 128
          %s817 = scalar_lea.vmem [#allocation9], %s816
          %818 = dma.done %s814, 2048
        $region72: #{tpu_custom_call.1} parent=67 // pred_fallthru
          _
      $region68: #{tpu_custom_call.1} parent=5 // pred_fallthru
        _
    $region6: #{tpu_custom_call.1} parent=1 // loop_footer
      %s27 = sadd.s32 1, %s23
    $region7: #{tpu_custom_call.1} parent=1 // loop_footer_branch
      %22 = sbr.rel target = $region3
    $region8: #{tpu_custom_call.1} parent=1 // loop_exit
      _
    %819 = vsyncpa [#allocation4], 1
    %s820 = scalar_lea.sflag [#allocation4], 1
    %821 = vsyncpa %s820, 1
    %822 = vsyncpa [#allocation7], 1
    %s823 = scalar_lea.sflag [#allocation7], 1
    %824 = vsyncpa %s823, 1
    %825 = vsyncpa [#allocation5], 1
    %s826 = scalar_lea.sflag [#allocation5], 1
    %827 = vsyncpa %s826, 1

</llo_original>
